<compile_context>
chip_gen: v6e
topology: v6e:2x2x1
jax: 0.10.0
libtpu: 0.0.40
codegen_flags: <defaults>
</compile_context>

<pallas_src>
import functools

import jax
import jax.numpy as jnp
from jax.experimental import pallas as pl
from jax.experimental.pallas import tpu as pltpu


def _round_up(x, m):
    return (x + m - 1) // m * m


def _head_kernel(x_ref, fcw_ref, fcb_ref, gamma_ref, beta_ref, ow_ref, ob_ref,
                 out_ref):
    """One batch tile of the classification head.

    x_ref:     [4, TB, H]   CLS hidden state of the last-4 backbone layers
    fcw_ref:   [4H, 256]    fc weight (matmul dtype: bf16 or f32)
    fcb_ref:   [1, 256]     fc bias (f32)
    gamma/beta:[1, 256]     LayerNorm params (f32)
    ow_ref:    [256, Cp]    out weight, lane-padded to Cp=128 cols (matmul dtype)
    ob_ref:    [1, Cp]      out bias, lane-padded (f32)
    out_ref:   [TB, Cp]     lane-dense logits (f32); caller slices [:, :n_classes]
    """
    h_dim = x_ref.shape[2]
    mm_dtype = fcw_ref.dtype

    # Dropout (eval) -> identity.  LeakyReLU (negative_slope=0.01) in f32.
    # The 4-layer feature concat is fused as 4 partial matmuls accumulating in
    # f32 on the MXU (same FLOPs as the concatenated matmul).
    h = None
    for l in range(4):                                   # static unroll
        xl = x_ref[l].astype(jnp.float32)
        xl = jnp.where(xl >= 0.0, xl, 0.01 * xl)
        part = jnp.dot(xl.astype(mm_dtype),
                       fcw_ref[l * h_dim:(l + 1) * h_dim, :],
                       preferred_element_type=jnp.float32)
        h = part if h is None else h + part
    h = h + fcb_ref[...]

    # LayerNorm(256), eps=1e-5 (PyTorch default), all-f32 elementwise.
    mean = jnp.mean(h, axis=-1, keepdims=True)
    cent = h - mean
    var = jnp.mean(cent * cent, axis=-1, keepdims=True)
    h = cent * jax.lax.rsqrt(var + 1e-5)
    h = h * gamma_ref[...] + beta_ref[...]

    # Dropout (eval) -> identity.  out: Linear(256 -> Cp), lane-dense store.
    logits = jnp.dot(h.astype(mm_dtype), ow_ref[...],
                     preferred_element_type=jnp.float32)
    out_ref[...] = (logits + ob_ref[...]).astype(out_ref.dtype)


def tg_classifier_head(cls4, fc_w, fc_b, ln_g, ln_b, out_w, out_b,
                       *, tb=128, matmul_dtype=jnp.bfloat16):
    """cls4: [4, B, H] CLS states of last 4 layers.  Returns [B, n_classes] f32."""
    L, B, H = cls4.shape
    assert L == 4
    f_in, f_hid = fc_w.shape                      # (4H, 256)
    assert f_in == 4 * H
    n_classes = out_w.shape[1]
    c_pad = _round_up(max(n_classes, 128), 128)   # lane-dense output width

    # Batch tiling: TB rows per grid step.  Sublane granularity is 16 for 2-byte
    # matmul dtypes, 8 for f32.  TB=128 default works on all generations.
    sub = 16 if jnp.dtype(matmul_dtype).itemsize == 2 else 8
    b_pad = _round_up(max(B, sub), sub)
    tb = _round_up(min(tb, b_pad), sub)
    b_pad = _round_up(b_pad, tb)

    x = cls4.astype(matmul_dtype)                 # halves activation HBM bytes (bf16)
    if b_pad != B:
        x = jnp.pad(x, ((0, 0), (0, b_pad - B), (0, 0)))

    # Weights in matmul dtype; out Linear lane-padded n_classes -> c_pad (zeros).
    fc_w_m = fc_w.astype(matmul_dtype)
    out_w_p = jnp.zeros((f_hid, c_pad), matmul_dtype).at[:, :n_classes].set(
        out_w.astype(matmul_dtype))
    out_b_p = jnp.zeros((1, c_pad), jnp.float32).at[0, :n_classes].set(
        out_b.astype(jnp.float32))
    fc_b_r = fc_b.reshape(1, f_hid).astype(jnp.float32)
    ln_g_r = ln_g.reshape(1, f_hid).astype(jnp.float32)
    ln_b_r = ln_b.reshape(1, f_hid).astype(jnp.float32)

    const = lambda i: (0, 0)                      # weights/biases stay VMEM-resident

    out = pl.pallas_call(
        _head_kernel,
        out_shape=jax.ShapeDtypeStruct((b_pad, c_pad), jnp.float32),
        grid_spec=pltpu.PrefetchScalarGridSpec(
            num_scalar_prefetch=0,
            grid=(b_pad // tb,),
            in_specs=[
                pl.BlockSpec((4, tb, H), lambda i: (0, i, 0)),
                pl.BlockSpec((f_in, f_hid), const),
                pl.BlockSpec((1, f_hid), const),
                pl.BlockSpec((1, f_hid), const),
                pl.BlockSpec((1, f_hid), const),
                pl.BlockSpec((f_hid, c_pad), const),
                pl.BlockSpec((1, c_pad), const),
            ],
            out_specs=pl.BlockSpec((tb, c_pad), lambda i: (i, 0)),
        ),
        compiler_params=pltpu.CompilerParams(
            # Batch tiles are independent: shard across the 2 TCs on v7x.
            dimension_semantics=("parallel",),
        ),
    )(x, fc_w_m, fc_b_r, ln_g_r, ln_b_r, out_w_p, out_b_p)
    return out[:B, :n_classes]


def tg_classifier_forward(hidden_states_last4, params, *, tb=128,
                          matmul_dtype=jnp.bfloat16):
    """hidden_states_last4: [4, B, S, H] — the backbone's last 4 hidden states."""
    # Glue: CLS token (seq position 0) of each layer -> [4, B, H].  The feature
    # concat is fused inside the kernel, so no [B, 4H] activation hits HBM.
    cls4 = hidden_states_last4[:, :, 0, :]
    return {"logits": tg_classifier_head(cls4, *params, tb=tb,
                                         matmul_dtype=matmul_dtype)}


def _reference(hidden_states_last4, params):
    fc_w, fc_b, ln_g, ln_b, out_w, out_b = params
    cls = hidden_states_last4[:, :, 0, :]
    pooled = jnp.concatenate([cls[0], cls[1], cls[2], cls[3]], axis=-1)
    x = jnp.where(pooled >= 0, pooled, 0.01 * pooled)
    h = x @ fc_w + fc_b
    mean = jnp.mean(h, axis=-1, keepdims=True)
    var = jnp.mean((h - mean) ** 2, axis=-1, keepdims=True)
    h = (h - mean) / jnp.sqrt(var + 1e-5) * ln_g + ln_b
    return h @ out_w + out_b


if __name__ == "__main__":
    # Small synthetic shapes consistent with the forward:
    #   batch=8, seq=8, backbone hidden_size=64  ->  4*H = 256 (fc input)
    B, S, H, N_CLASSES = 8, 8, 64, 3
    key = jax.random.PRNGKey(0)
    k_hs, k_fcw, k_fcb, k_ow, k_ob = jax.random.split(key, 5)

    # TODO(synk): pretrained BERT backbone not implemented — synthetic hidden
    # states stand in for outputs[2][-4:].
    hidden_states_last4 = jax.random.normal(k_hs, (4, B, S, H), jnp.float32)

    # Deterministic parameter init (stored already transposed: [in, out]).
    fc_w = 0.02 * jax.random.normal(k_fcw, (4 * H, 256), jnp.float32)
    fc_b = 0.01 * jax.random.normal(k_fcb, (256,), jnp.float32)
    ln_g = jnp.ones((256,), jnp.float32)
    ln_b = jnp.zeros((256,), jnp.float32)
    out_w = 0.02 * jax.random.normal(k_ow, (256, N_CLASSES), jnp.float32)
    out_b = 0.01 * jax.random.normal(k_ob, (N_CLASSES,), jnp.float32)
    params = (fc_w, fc_b, ln_g, ln_b, out_w, out_b)

    ref = _reference(hidden_states_last4, params)

    # Default (performance) path: bf16 MXU operands, f32 accumulate/elementwise.
    fwd_bf16 = jax.jit(functools.partial(tg_classifier_forward,
                                         matmul_dtype=jnp.bfloat16))
    logits_bf16 = jax.block_until_ready(
        fwd_bf16(hidden_states_last4, params)["logits"])
    assert logits_bf16.shape == (B, N_CLASSES)
    assert jnp.allclose(logits_bf16, ref, atol=5e-2, rtol=5e-2)

    # Exact-semantics path: f32 MXU operands (tight tolerance vs. reference).
    fwd_f32 = jax.jit(functools.partial(tg_classifier_forward,
                                        matmul_dtype=jnp.float32))
    logits_f32 = jax.block_until_ready(
        fwd_f32(hidden_states_last4, params)["logits"])
    assert logits_f32.shape == (B, N_CLASSES)
    assert jnp.allclose(logits_f32, ref, atol=1e-3, rtol=1e-3)

    print("KERNEL_OK")
</pallas_src>

<mosaic_0001>
module attributes {stable_mosaic.version = 11 : i64} {
  func.func @_head_kernel(%arg0: i32, %arg1: memref<4x16x64xbf16, #tpu.memory_space<vmem>>, %arg2: memref<256x256xbf16, #tpu.memory_space<vmem>>, %arg3: memref<1x256xf32, #tpu.memory_space<vmem>>, %arg4: memref<1x256xf32, #tpu.memory_space<vmem>>, %arg5: memref<1x256xf32, #tpu.memory_space<vmem>>, %arg6: memref<256x128xbf16, #tpu.memory_space<vmem>>, %arg7: memref<1x128xf32, #tpu.memory_space<vmem>>, %arg8: memref<16x128xf32, #tpu.memory_space<vmem>>) attributes {dimension_semantics = [#tpu.dimension_semantics<parallel>], iteration_bounds = array<i64: 1>, scalar_prefetch = 0 : i64, scratch_operands = 0 : i64, tpu.core_type = #tpu.core_type<tc>, window_params = [{transform_indices = @transform_0, window_bounds = array<i64: 4, 16, 64>}, {pipeline_mode = #tpu.pipeline_mode<synchronous>, transform_indices = @transform_1, window_bounds = array<i64: 256, 256>}, {pipeline_mode = #tpu.pipeline_mode<synchronous>, transform_indices = @transform_2, window_bounds = array<i64: 1, 256>}, {pipeline_mode = #tpu.pipeline_mode<synchronous>, transform_indices = @transform_3, window_bounds = array<i64: 1, 256>}, {pipeline_mode = #tpu.pipeline_mode<synchronous>, transform_indices = @transform_4, window_bounds = array<i64: 1, 256>}, {pipeline_mode = #tpu.pipeline_mode<synchronous>, transform_indices = @transform_5, window_bounds = array<i64: 256, 128>}, {pipeline_mode = #tpu.pipeline_mode<synchronous>, transform_indices = @transform_6, window_bounds = array<i64: 1, 128>}, {transform_indices = @transform_7, window_bounds = array<i64: 16, 128>}]} {
    %c0 = arith.constant 0 : index
    %c0_0 = arith.constant 0 : index
    %c0_1 = arith.constant 0 : index
    %0 = vector.load %arg1[%c0, %c0_0, %c0_1] : memref<4x16x64xbf16, #tpu.memory_space<vmem>>, vector<1x16x64xbf16>
    %1 = vector.shape_cast %0 : vector<1x16x64xbf16> to vector<16x64xbf16>
    %2 = arith.extf %1 : vector<16x64xbf16> to vector<16x64xf32>
    %cst = arith.constant 0.000000e+00 : f32
    %3 = vector.broadcast %cst : f32 to vector<16x64xf32>
    %4 = arith.cmpf oge, %2, %3 : vector<16x64xf32>
    %cst_2 = arith.constant 0.00999999977 : f32
    %5 = vector.broadcast %cst_2 : f32 to vector<16x64xf32>
    %6 = arith.mulf %5, %2 : vector<16x64xf32>
    %7 = arith.select %4, %2, %6 : vector<16x64xi1>, vector<16x64xf32>
    %8 = arith.truncf %7 : vector<16x64xf32> to vector<16x64xbf16>
    %c0_3 = arith.constant 0 : index
    %c0_4 = arith.constant 0 : index
    %9 = vector.load %arg2[%c0_3, %c0_4] : memref<256x256xbf16, #tpu.memory_space<vmem>>, vector<64x256xbf16>
    %cst_5 = arith.constant dense<0.000000e+00> : vector<16x256xf32>
    %10 = tpu.matmul %8, %9, %cst_5 {dimension_numbers = #tpu.dot_dimension_numbers<[1], [0], [0], [1], [0, 0, 1, 1], [], []>} : vector<16x64xbf16>, vector<64x256xbf16>, vector<16x256xf32> -> vector<16x256xf32>
    %c1 = arith.constant 1 : index
    %c0_6 = arith.constant 0 : index
    %c0_7 = arith.constant 0 : index
    %11 = vector.load %arg1[%c1, %c0_6, %c0_7] : memref<4x16x64xbf16, #tpu.memory_space<vmem>>, vector<1x16x64xbf16>
    %12 = vector.shape_cast %11 : vector<1x16x64xbf16> to vector<16x64xbf16>
    %13 = arith.extf %12 : vector<16x64xbf16> to vector<16x64xf32>
    %cst_8 = arith.constant 0.000000e+00 : f32
    %14 = vector.broadcast %cst_8 : f32 to vector<16x64xf32>
    %15 = arith.cmpf oge, %13, %14 : vector<16x64xf32>
    %cst_9 = arith.constant 0.00999999977 : f32
    %16 = vector.broadcast %cst_9 : f32 to vector<16x64xf32>
    %17 = arith.mulf %16, %13 : vector<16x64xf32>
    %18 = arith.select %15, %13, %17 : vector<16x64xi1>, vector<16x64xf32>
    %19 = arith.truncf %18 : vector<16x64xf32> to vector<16x64xbf16>
    %c64 = arith.constant 64 : index
    %c0_10 = arith.constant 0 : index
    %20 = vector.load %arg2[%c64, %c0_10] : memref<256x256xbf16, #tpu.memory_space<vmem>>, vector<64x256xbf16>
    %cst_11 = arith.constant dense<0.000000e+00> : vector<16x256xf32>
    %21 = tpu.matmul %19, %20, %cst_11 {dimension_numbers = #tpu.dot_dimension_numbers<[1], [0], [0], [1], [0, 0, 1, 1], [], []>} : vector<16x64xbf16>, vector<64x256xbf16>, vector<16x256xf32> -> vector<16x256xf32>
    %22 = arith.addf %10, %21 : vector<16x256xf32>
    %c2 = arith.constant 2 : index
    %c0_12 = arith.constant 0 : index
    %c0_13 = arith.constant 0 : index
    %23 = vector.load %arg1[%c2, %c0_12, %c0_13] : memref<4x16x64xbf16, #tpu.memory_space<vmem>>, vector<1x16x64xbf16>
    %24 = vector.shape_cast %23 : vector<1x16x64xbf16> to vector<16x64xbf16>
    %25 = arith.extf %24 : vector<16x64xbf16> to vector<16x64xf32>
    %cst_14 = arith.constant 0.000000e+00 : f32
    %26 = vector.broadcast %cst_14 : f32 to vector<16x64xf32>
    %27 = arith.cmpf oge, %25, %26 : vector<16x64xf32>
    %cst_15 = arith.constant 0.00999999977 : f32
    %28 = vector.broadcast %cst_15 : f32 to vector<16x64xf32>
    %29 = arith.mulf %28, %25 : vector<16x64xf32>
    %30 = arith.select %27, %25, %29 : vector<16x64xi1>, vector<16x64xf32>
    %31 = arith.truncf %30 : vector<16x64xf32> to vector<16x64xbf16>
    %c128 = arith.constant 128 : index
    %c0_16 = arith.constant 0 : index
    %32 = vector.load %arg2[%c128, %c0_16] : memref<256x256xbf16, #tpu.memory_space<vmem>>, vector<64x256xbf16>
    %cst_17 = arith.constant dense<0.000000e+00> : vector<16x256xf32>
    %33 = tpu.matmul %31, %32, %cst_17 {dimension_numbers = #tpu.dot_dimension_numbers<[1], [0], [0], [1], [0, 0, 1, 1], [], []>} : vector<16x64xbf16>, vector<64x256xbf16>, vector<16x256xf32> -> vector<16x256xf32>
    %34 = arith.addf %22, %33 : vector<16x256xf32>
    %c3 = arith.constant 3 : index
    %c0_18 = arith.constant 0 : index
    %c0_19 = arith.constant 0 : index
    %35 = vector.load %arg1[%c3, %c0_18, %c0_19] : memref<4x16x64xbf16, #tpu.memory_space<vmem>>, vector<1x16x64xbf16>
    %36 = vector.shape_cast %35 : vector<1x16x64xbf16> to vector<16x64xbf16>
    %37 = arith.extf %36 : vector<16x64xbf16> to vector<16x64xf32>
    %cst_20 = arith.constant 0.000000e+00 : f32
    %38 = vector.broadcast %cst_20 : f32 to vector<16x64xf32>
    %39 = arith.cmpf oge, %37, %38 : vector<16x64xf32>
    %cst_21 = arith.constant 0.00999999977 : f32
    %40 = vector.broadcast %cst_21 : f32 to vector<16x64xf32>
    %41 = arith.mulf %40, %37 : vector<16x64xf32>
    %42 = arith.select %39, %37, %41 : vector<16x64xi1>, vector<16x64xf32>
    %43 = arith.truncf %42 : vector<16x64xf32> to vector<16x64xbf16>
    %c192 = arith.constant 192 : index
    %c0_22 = arith.constant 0 : index
    %44 = vector.load %arg2[%c192, %c0_22] : memref<256x256xbf16, #tpu.memory_space<vmem>>, vector<64x256xbf16>
    %cst_23 = arith.constant dense<0.000000e+00> : vector<16x256xf32>
    %45 = tpu.matmul %43, %44, %cst_23 {dimension_numbers = #tpu.dot_dimension_numbers<[1], [0], [0], [1], [0, 0, 1, 1], [], []>} : vector<16x64xbf16>, vector<64x256xbf16>, vector<16x256xf32> -> vector<16x256xf32>
    %46 = arith.addf %34, %45 : vector<16x256xf32>
    %c0_24 = arith.constant 0 : index
    %c0_25 = arith.constant 0 : index
    %47 = vector.load %arg3[%c0_24, %c0_25] : memref<1x256xf32, #tpu.memory_space<vmem>>, vector<1x256xf32>
    %48 = vector.broadcast %47 : vector<1x256xf32> to vector<16x256xf32>
    %49 = arith.addf %46, %48 : vector<16x256xf32>
    %cst_26 = arith.constant dense<0.000000e+00> : vector<16xf32>
    %50 = vector.multi_reduction <add>, %49, %cst_26 [1] : vector<16x256xf32> to vector<16xf32>
    %51 = vector.shape_cast %50 : vector<16xf32> to vector<16x1xf32>
    %cst_27 = arith.constant 2.560000e+02 : f32
    %52 = vector.broadcast %cst_27 : f32 to vector<16x1xf32>
    %53 = arith.divf %51, %52 : vector<16x1xf32>
    %54 = vector.broadcast %53 : vector<16x1xf32> to vector<16x256xf32>
    %55 = arith.subf %49, %54 : vector<16x256xf32>
    %56 = arith.mulf %55, %55 : vector<16x256xf32>
    %cst_28 = arith.constant dense<0.000000e+00> : vector<16xf32>
    %57 = vector.multi_reduction <add>, %56, %cst_28 [1] : vector<16x256xf32> to vector<16xf32>
    %58 = vector.shape_cast %57 : vector<16xf32> to vector<16x1xf32>
    %cst_29 = arith.constant 2.560000e+02 : f32
    %59 = vector.broadcast %cst_29 : f32 to vector<16x1xf32>
    %60 = arith.divf %58, %59 : vector<16x1xf32>
    %cst_30 = arith.constant 9.99999974E-6 : f32
    %61 = vector.broadcast %cst_30 : f32 to vector<16x1xf32>
    %62 = arith.addf %60, %61 : vector<16x1xf32>
    %63 = math.rsqrt %62 : vector<16x1xf32>
    %64 = vector.broadcast %63 : vector<16x1xf32> to vector<16x256xf32>
    %65 = arith.mulf %55, %64 : vector<16x256xf32>
    %c0_31 = arith.constant 0 : index
    %c0_32 = arith.constant 0 : index
    %66 = vector.load %arg4[%c0_31, %c0_32] : memref<1x256xf32, #tpu.memory_space<vmem>>, vector<1x256xf32>
    %67 = vector.broadcast %66 : vector<1x256xf32> to vector<16x256xf32>
    %68 = arith.mulf %65, %67 : vector<16x256xf32>
    %c0_33 = arith.constant 0 : index
    %c0_34 = arith.constant 0 : index
    %69 = vector.load %arg5[%c0_33, %c0_34] : memref<1x256xf32, #tpu.memory_space<vmem>>, vector<1x256xf32>
    %70 = vector.broadcast %69 : vector<1x256xf32> to vector<16x256xf32>
    %71 = arith.addf %68, %70 : vector<16x256xf32>
    %72 = arith.truncf %71 : vector<16x256xf32> to vector<16x256xbf16>
    %c0_35 = arith.constant 0 : index
    %c0_36 = arith.constant 0 : index
    %73 = vector.load %arg6[%c0_35, %c0_36] : memref<256x128xbf16, #tpu.memory_space<vmem>>, vector<256x128xbf16>
    %cst_37 = arith.constant dense<0.000000e+00> : vector<16x128xf32>
    %74 = tpu.matmul %72, %73, %cst_37 {dimension_numbers = #tpu.dot_dimension_numbers<[1], [0], [0], [1], [0, 0, 1, 1], [], []>} : vector<16x256xbf16>, vector<256x128xbf16>, vector<16x128xf32> -> vector<16x128xf32>
    %c0_38 = arith.constant 0 : index
    %c0_39 = arith.constant 0 : index
    %75 = vector.load %arg7[%c0_38, %c0_39] : memref<1x128xf32, #tpu.memory_space<vmem>>, vector<1x128xf32>
    %76 = vector.broadcast %75 : vector<1x128xf32> to vector<16x128xf32>
    %77 = arith.addf %74, %76 : vector<16x128xf32>
    %c0_40 = arith.constant 0 : index
    %c0_41 = arith.constant 0 : index
    %78 = vector.load %arg8[%c0_40, %c0_41] : memref<16x128xf32, #tpu.memory_space<vmem>>, vector<16x128xf32>
    tpu.vector_store %arg8[%c0_40, %c0_41], %77 {strides = array<i32>} : memref<16x128xf32, #tpu.memory_space<vmem>>, vector<16x128xf32>,
    return
  }
  func.func @transform_0(%arg0: i32) -> (i32, i32, i32) {
    %c0_i32 = arith.constant 0 : i32
    %c0_i32_0 = arith.constant 0 : i32
    %c0_i32_1 = arith.constant 0 : i32
    return %c0_i32, %arg0, %c0_i32_0 : i32, i32, i32
  }
  func.func @transform_1(%arg0: i32) -> (i32, i32) {
    %c0_i32 = arith.constant 0 : i32
    %c0_i32_0 = arith.constant 0 : i32
    %c0_i32_1 = arith.constant 0 : i32
    return %c0_i32, %c0_i32_0 : i32, i32
  }
  func.func @transform_2(%arg0: i32) -> (i32, i32) {
    %c0_i32 = arith.constant 0 : i32
    %c0_i32_0 = arith.constant 0 : i32
    %c0_i32_1 = arith.constant 0 : i32
    return %c0_i32, %c0_i32_0 : i32, i32
  }
  func.func @transform_3(%arg0: i32) -> (i32, i32) {
    %c0_i32 = arith.constant 0 : i32
    %c0_i32_0 = arith.constant 0 : i32
    %c0_i32_1 = arith.constant 0 : i32
    return %c0_i32, %c0_i32_0 : i32, i32
  }
  func.func @transform_4(%arg0: i32) -> (i32, i32) {
    %c0_i32 = arith.constant 0 : i32
    %c0_i32_0 = arith.constant 0 : i32
    %c0_i32_1 = arith.constant 0 : i32
    return %c0_i32, %c0_i32_0 : i32, i32
  }
  func.func @transform_5(%arg0: i32) -> (i32, i32) {
    %c0_i32 = arith.constant 0 : i32
    %c0_i32_0 = arith.constant 0 : i32
    %c0_i32_1 = arith.constant 0 : i32
    return %c0_i32, %c0_i32_0 : i32, i32
  }
  func.func @transform_6(%arg0: i32) -> (i32, i32) {
    %c0_i32 = arith.constant 0 : i32
    %c0_i32_0 = arith.constant 0 : i32
    %c0_i32_1 = arith.constant 0 : i32
    return %c0_i32, %c0_i32_0 : i32, i32
  }
  func.func @transform_7(%arg0: i32) -> (i32, i32) {
    %c0_i32 = arith.constant 0 : i32
    %c0_i32_0 = arith.constant 0 : i32
    return %arg0, %c0_i32 : i32, i32
  }
}

</mosaic_0001>

<llo_original>
// kernel: tg_classifier_forward.1
$region0: #{tg_classifier_forward.1}
  #allocation0 [shape = 'u32[]', space=smem, size = 0x4, offset = 0x4, fixed_abs, tag = 'smem constant byte address 0x4 - core index']
  #allocation1 [shape = 'u32[144,128]{1,0:T(1,128)}', space=vmem, size = 0x12000, scoped, tag = 'internal scratch']
  %s0 = inlined_call_operand.vmem [shape: bf16[4,16,64], index: 0, kind: input, shape index: {}]
  %s1 = inlined_call_operand.vmem [shape: bf16[256,256], index: 1, kind: input, shape index: {}]
  %s2 = inlined_call_operand.vmem [shape: f32[1,256], index: 2, kind: input, shape index: {}]
  %s3 = inlined_call_operand.vmem [shape: f32[1,256], index: 3, kind: input, shape index: {}]
  %s4 = inlined_call_operand.vmem [shape: f32[1,256], index: 4, kind: input, shape index: {}]
  %s5 = inlined_call_operand.vmem [shape: bf16[256,128], index: 5, kind: input, shape index: {}]
  %s6 = inlined_call_operand.vmem [shape: f32[1,128], index: 6, kind: input, shape index: {}]
  %s7 = inlined_call_operand.vmem [shape: f32[16,128], index: 7, kind: output, shape index: {}]
  %s8 = sld [smem:[#allocation0]]
  $region38: #{tg_classifier_forward.1} parent=0
    _
  %s10 = ssub.s32 1, %s8
  %s11 = scalar_select 0, %s10, %s8
  // Predicated region
  $region2: #{tg_classifier_forward.1} parent=0 // pred_check
    _
  $region3: #{tg_classifier_forward.1} parent=0 // pred_check_branch
    %13 = sbr.rel (0) target = $region5
  $region4: #{tg_classifier_forward.1} parent=0 // pred_region
    _
  $region5: #{tg_classifier_forward.1} parent=0 // pred_fallthru
    _
  // Predicated region
  $region6: #{tg_classifier_forward.1} parent=0 // pred_check
    _
  $region7: #{tg_classifier_forward.1} parent=0 // pred_check_branch
    %15 = sbr.rel (0) target = $region9
  $region8: #{tg_classifier_forward.1} parent=0 // pred_region
    _
  $region9: #{tg_classifier_forward.1} parent=0 // pred_fallthru
    _
  // Predicated region
  $region10: #{tg_classifier_forward.1} parent=0 // pred_check
    _
  $region11: #{tg_classifier_forward.1} parent=0 // pred_check_branch
    %17 = sbr.rel (0) target = $region13
  $region12: #{tg_classifier_forward.1} parent=0 // pred_region
    _
  $region13: #{tg_classifier_forward.1} parent=0 // pred_fallthru
    _
  // Predicated region
  $region14: #{tg_classifier_forward.1} parent=0 // pred_check
    _
  $region15: #{tg_classifier_forward.1} parent=0 // pred_check_branch
    %19 = sbr.rel (0) target = $region17
  $region16: #{tg_classifier_forward.1} parent=0 // pred_region
    _
  $region17: #{tg_classifier_forward.1} parent=0 // pred_fallthru
    _
  // Predicated region
  $region18: #{tg_classifier_forward.1} parent=0 // pred_check
    _
  $region19: #{tg_classifier_forward.1} parent=0 // pred_check_branch
    %21 = sbr.rel (0) target = $region21
  $region20: #{tg_classifier_forward.1} parent=0 // pred_region
    _
  $region21: #{tg_classifier_forward.1} parent=0 // pred_fallthru
    _
  // Predicated region
  $region22: #{tg_classifier_forward.1} parent=0 // pred_check
    _
  $region23: #{tg_classifier_forward.1} parent=0 // pred_check_branch
    %23 = sbr.rel (0) target = $region25
  $region24: #{tg_classifier_forward.1} parent=0 // pred_region
    _
  $region25: #{tg_classifier_forward.1} parent=0 // pred_fallthru
    _
  // Predicated region
  $region26: #{tg_classifier_forward.1} parent=0 // pred_check
    _
  $region27: #{tg_classifier_forward.1} parent=0 // pred_check_branch
    %25 = sbr.rel (0) target = $region29
  $region28: #{tg_classifier_forward.1} parent=0 // pred_region
    _
  $region29: #{tg_classifier_forward.1} parent=0 // pred_fallthru
    _
  %v27 = vld [vmem:[%s0] sm:$0xf]
  %v28 = vld [vmem:[%s0 + $0x4] sm:$0xf]
  %v29 = vunpack.c.l.bf16 %v27
  %v30 = vunpack.c.l.bf16 %v28
  %vm31 = vcmp.ge.f32.partialorder %v29, 0.0
  %vm32 = vcmp.ge.f32.partialorder %v30, 0.0
  %v33 = vmul.f32 %v29, 0.01
  %v34 = vmul.f32 %v30, 0.01
  %v35 = vsel %vm31, %v29, %v33
  %v36 = vsel %vm32, %v30, %v34
  %v37 = vpack.c.bf16 %v36, %v35
  %v38 = vld [vmem:[%s1] sm:$0xff]
  %v39 = vld [vmem:[%s1 + $0x8] sm:$0xff]
  %v40 = vld [vmem:[%s1 + $0x10] sm:$0xff]
  %v41 = vld [vmem:[%s1 + $0x18] sm:$0xff]
  %v42 = vld [vmem:[%s1 + $0x20] sm:$0xff]
  %v43 = vld [vmem:[%s1 + $0x28] sm:$0xff]
  %v44 = vld [vmem:[%s1 + $0x30] sm:$0xff]
  %v45 = vld [vmem:[%s1 + $0x38] sm:$0xff]
  %s46 = scalar_lea.vmem %s0, 8
  %v47 = vld [vmem:[%s46] sm:$0xf]
  %v48 = vld [vmem:[%s46 + $0x4] sm:$0xf]
  %v49 = vunpack.c.l.bf16 %v47
  %v50 = vunpack.c.l.bf16 %v48
  %vm51 = vcmp.ge.f32.partialorder %v49, 0.0
  %vm52 = vcmp.ge.f32.partialorder %v50, 0.0
  %v53 = vmul.f32 %v49, 0.01
  %v54 = vmul.f32 %v50, 0.01
  %v55 = vsel %vm51, %v49, %v53
  %v56 = vsel %vm52, %v50, %v54
  %v57 = vpack.c.bf16 %v56, %v55
  %v58 = vld [vmem:[%s1 + $0x40] sm:$0xff]
  %v59 = vld [vmem:[%s1 + $0x48] sm:$0xff]
  %v60 = vld [vmem:[%s1 + $0x50] sm:$0xff]
  %v61 = vld [vmem:[%s1 + $0x58] sm:$0xff]
  %v62 = vld [vmem:[%s1 + $0x60] sm:$0xff]
  %v63 = vld [vmem:[%s1 + $0x68] sm:$0xff]
  %v64 = vld [vmem:[%s1 + $0x70] sm:$0xff]
  %v65 = vld [vmem:[%s1 + $0x78] sm:$0xff]
  %v74 = vunpack.c.l.b16 %v58
  %v75 = vunpack.c.h.b16 %v58
  %v76 = vunpack.c.l.b16 %v59
  %v77 = vunpack.c.h.b16 %v59
  %v78 = vunpack.c.l.b16 %v60
  %v79 = vunpack.c.h.b16 %v60
  %v80 = vunpack.c.l.b16 %v61
  %v81 = vunpack.c.h.b16 %v61
  %v82 = vunpack.c.l.b16 %v62
  %v83 = vunpack.c.h.b16 %v62
  %v84 = vunpack.c.l.b16 %v63
  %v85 = vunpack.c.h.b16 %v63
  %v86 = vunpack.c.l.b16 %v64
  %v87 = vunpack.c.h.b16 %v64
  %v88 = vunpack.c.l.b16 %v65
  %v89 = vunpack.c.h.b16 %v65
  %v90 = vpack.c.b16 %v76, %v74
  %v91 = vpack.c.b16 %v77, %v75
  %v92 = vpack.c.b16 %v80, %v78
  %v93 = vpack.c.b16 %v81, %v79
  %v94 = vpack.c.b16 %v84, %v82
  %v95 = vpack.c.b16 %v85, %v83
  %v96 = vpack.c.b16 %v88, %v86
  %v97 = vpack.c.b16 %v89, %v87
  %vm106 = vcmask 523264
  %v108 = vsel %vm106, %v57, 0
  %110 = vmatprep.subr.bf16.mxu0 0
  %111 = vmatpush1.bf16.msra.mxu0 0
  %112 = vmatprep.subr.bf16.mxu0 0
  %113 = vmatpush1.bf16.msra.mxu0 0
  %114 = vmatprep.subr.bf16.mxu0 0
  %115 = vmatpush1.bf16.msra.mxu0 0
  %116 = vmatprep.subr.bf16.mxu0 0
  %117 = vmatpush1.bf16.msra.mxu0 0
  %118 = vmatprep.subr.bf16.mxu0 %v97
  %119 = vmatpush1.bf16.msra.mxu0 %v96
  %120 = vmatprep.subr.bf16.mxu0 %v95
  %121 = vmatpush1.bf16.msra.mxu0 %v94
  %122 = vmatprep.subr.bf16.mxu0 %v93
  %123 = vmatpush1.bf16.msra.mxu0 %v92
  %124 = vmatprep.subr.bf16.mxu0 %v91
  %125 = vmatpush1.bf16.msra.mxu0 %v90
  %126 = vmatprep.subr.bf16.mxu0 0
  %127 = vmatpush2.bf16.msra.mxu0 0
  %128 = vmatprep.subr.bf16.mxu0 0
  %129 = vmatpush2.bf16.msra.mxu0 0
  %130 = vmatprep.subr.bf16.mxu0 0
  %131 = vmatpush2.bf16.msra.mxu0 0
  %132 = vmatprep.subr.bf16.mxu0 0
  %133 = vmatpush2.bf16.msra.mxu0 0
  %134 = vmatprep.subr.bf16.mxu0 0
  %135 = vmatpush2.bf16.msra.mxu0 0
  %136 = vmatprep.subr.bf16.mxu0 0
  %137 = vmatpush2.bf16.msra.mxu0 0
  %138 = vmatprep.subr.bf16.mxu0 0
  %139 = vmatpush2.bf16.msra.mxu0 0
  %140 = vmatprep.subr.bf16.mxu0 0
  %141 = vmatpush2.bf16.msra.mxu0 0
  %142 = vmatprep.mubr.bf16.mxu0 0
  %143 = vmatmul.mubr.bf16.gmra.mxu0 %v108
  %v144 = vpop.f32.mrf.mxu0
  %v145 = vadd.f32 0.0, %v144
  %v146 = vpop.f32.mrf.mxu0
  %v147 = vadd.f32 0.0, %v146
  %v148 = vpop.f32.mrf.mxu0
  %v149 = vadd.f32 0.0, %v148
  %v150 = vpop.f32.mrf.mxu0
  %v151 = vadd.f32 0.0, %v150
  %152 = vdwg.mxu0
  %v161 = vunpack.c.l.b16 %v38
  %v162 = vunpack.c.h.b16 %v38
  %v163 = vunpack.c.l.b16 %v39
  %v164 = vunpack.c.h.b16 %v39
  %v165 = vunpack.c.l.b16 %v40
  %v166 = vunpack.c.h.b16 %v40
  %v167 = vunpack.c.l.b16 %v41
  %v168 = vunpack.c.h.b16 %v41
  %v169 = vunpack.c.l.b16 %v42
  %v170 = vunpack.c.h.b16 %v42
  %v171 = vunpack.c.l.b16 %v43
  %v172 = vunpack.c.h.b16 %v43
  %v173 = vunpack.c.l.b16 %v44
  %v174 = vunpack.c.h.b16 %v44
  %v175 = vunpack.c.l.b16 %v45
  %v176 = vunpack.c.h.b16 %v45
  %v177 = vpack.c.b16 %v163, %v161
  %v178 = vpack.c.b16 %v164, %v162
  %v179 = vpack.c.b16 %v167, %v165
  %v180 = vpack.c.b16 %v168, %v166
  %v181 = vpack.c.b16 %v171, %v169
  %v182 = vpack.c.b16 %v172, %v170
  %v183 = vpack.c.b16 %v175, %v173
  %v184 = vpack.c.b16 %v176, %v174
  %v194 = vsel %vm106, %v37, 0
  %196 = vmatprep.subr.bf16.mxu0 0
  %197 = vmatpush1.bf16.msra.mxu0 0
  %198 = vmatprep.subr.bf16.mxu0 0
  %199 = vmatpush1.bf16.msra.mxu0 0
  %200 = vmatprep.subr.bf16.mxu0 0
  %201 = vmatpush1.bf16.msra.mxu0 0
  %202 = vmatprep.subr.bf16.mxu0 0
  %203 = vmatpush1.bf16.msra.mxu0 0
  %204 = vmatprep.subr.bf16.mxu0 %v184
  %205 = vmatpush1.bf16.msra.mxu0 %v183
  %206 = vmatprep.subr.bf16.mxu0 %v182
  %207 = vmatpush1.bf16.msra.mxu0 %v181
  %208 = vmatprep.subr.bf16.mxu0 %v180
  %209 = vmatpush1.bf16.msra.mxu0 %v179
  %210 = vmatprep.subr.bf16.mxu0 %v178
  %211 = vmatpush1.bf16.msra.mxu0 %v177
  %212 = vmatprep.subr.bf16.mxu0 0
  %213 = vmatpush2.bf16.msra.mxu0 0
  %214 = vmatprep.subr.bf16.mxu0 0
  %215 = vmatpush2.bf16.msra.mxu0 0
  %216 = vmatprep.subr.bf16.mxu0 0
  %217 = vmatpush2.bf16.msra.mxu0 0
  %218 = vmatprep.subr.bf16.mxu0 0
  %219 = vmatpush2.bf16.msra.mxu0 0
  %220 = vmatprep.subr.bf16.mxu0 0
  %221 = vmatpush2.bf16.msra.mxu0 0
  %222 = vmatprep.subr.bf16.mxu0 0
  %223 = vmatpush2.bf16.msra.mxu0 0
  %224 = vmatprep.subr.bf16.mxu0 0
  %225 = vmatpush2.bf16.msra.mxu0 0
  %226 = vmatprep.subr.bf16.mxu0 0
  %227 = vmatpush2.bf16.msra.mxu0 0
  %228 = vmatprep.mubr.bf16.mxu0 0
  %229 = vmatmul.mubr.bf16.gmra.mxu0 %v194
  %v230 = vpop.f32.mrf.mxu0
  %v231 = vadd.f32 %v145, %v230
  %v232 = vpop.f32.mrf.mxu0
  %v233 = vadd.f32 %v147, %v232
  %v234 = vpop.f32.mrf.mxu0
  %v235 = vadd.f32 %v149, %v234
  %v236 = vpop.f32.mrf.mxu0
  %v237 = vadd.f32 %v151, %v236
  %238 = vdwg.mxu0
  %s239 = scalar_lea.vmem %s0, 16
  %v240 = vld [vmem:[%s239] sm:$0xf]
  %v241 = vld [vmem:[%s239 + $0x4] sm:$0xf]
  %v242 = vunpack.c.l.bf16 %v240
  %v243 = vunpack.c.l.bf16 %v241
  %vm244 = vcmp.ge.f32.partialorder %v242, 0.0
  %vm245 = vcmp.ge.f32.partialorder %v243, 0.0
  %v246 = vmul.f32 %v242, 0.01
  %v247 = vmul.f32 %v243, 0.01
  %v248 = vsel %vm244, %v242, %v246
  %v249 = vsel %vm245, %v243, %v247
  %v250 = vpack.c.bf16 %v249, %v248
  %v251 = vld [vmem:[%s1 + $0x80] sm:$0xff]
  %v252 = vld [vmem:[%s1 + $0x88] sm:$0xff]
  %v253 = vld [vmem:[%s1 + $0x90] sm:$0xff]
  %v254 = vld [vmem:[%s1 + $0x98] sm:$0xff]
  %v255 = vld [vmem:[%s1 + $0xa0] sm:$0xff]
  %v256 = vld [vmem:[%s1 + $0xa8] sm:$0xff]
  %v257 = vld [vmem:[%s1 + $0xb0] sm:$0xff]
  %v258 = vld [vmem:[%s1 + $0xb8] sm:$0xff]
  %v267 = vunpack.c.l.b16 %v251
  %v268 = vunpack.c.h.b16 %v251
  %v269 = vunpack.c.l.b16 %v252
  %v270 = vunpack.c.h.b16 %v252
  %v271 = vunpack.c.l.b16 %v253
  %v272 = vunpack.c.h.b16 %v253
  %v273 = vunpack.c.l.b16 %v254
  %v274 = vunpack.c.h.b16 %v254
  %v275 = vunpack.c.l.b16 %v255
  %v276 = vunpack.c.h.b16 %v255
  %v277 = vunpack.c.l.b16 %v256
  %v278 = vunpack.c.h.b16 %v256
  %v279 = vunpack.c.l.b16 %v257
  %v280 = vunpack.c.h.b16 %v257
  %v281 = vunpack.c.l.b16 %v258
  %v282 = vunpack.c.h.b16 %v258
  %v283 = vpack.c.b16 %v269, %v267
  %v284 = vpack.c.b16 %v270, %v268
  %v285 = vpack.c.b16 %v273, %v271
  %v286 = vpack.c.b16 %v274, %v272
  %v287 = vpack.c.b16 %v277, %v275
  %v288 = vpack.c.b16 %v278, %v276
  %v289 = vpack.c.b16 %v281, %v279
  %v290 = vpack.c.b16 %v282, %v280
  %v300 = vsel %vm106, %v250, 0
  %302 = vmatprep.subr.bf16.mxu0 0
  %303 = vmatpush1.bf16.msra.mxu0 0
  %304 = vmatprep.subr.bf16.mxu0 0
  %305 = vmatpush1.bf16.msra.mxu0 0
  %306 = vmatprep.subr.bf16.mxu0 0
  %307 = vmatpush1.bf16.msra.mxu0 0
  %308 = vmatprep.subr.bf16.mxu0 0
  %309 = vmatpush1.bf16.msra.mxu0 0
  %310 = vmatprep.subr.bf16.mxu0 %v290
  %311 = vmatpush1.bf16.msra.mxu0 %v289
  %312 = vmatprep.subr.bf16.mxu0 %v288
  %313 = vmatpush1.bf16.msra.mxu0 %v287
  %314 = vmatprep.subr.bf16.mxu0 %v286
  %315 = vmatpush1.bf16.msra.mxu0 %v285
  %316 = vmatprep.subr.bf16.mxu0 %v284
  %317 = vmatpush1.bf16.msra.mxu0 %v283
  %318 = vmatprep.subr.bf16.mxu0 0
  %319 = vmatpush2.bf16.msra.mxu0 0
  %320 = vmatprep.subr.bf16.mxu0 0
  %321 = vmatpush2.bf16.msra.mxu0 0
  %322 = vmatprep.subr.bf16.mxu0 0
  %323 = vmatpush2.bf16.msra.mxu0 0
  %324 = vmatprep.subr.bf16.mxu0 0
  %325 = vmatpush2.bf16.msra.mxu0 0
  %326 = vmatprep.subr.bf16.mxu0 0
  %327 = vmatpush2.bf16.msra.mxu0 0
  %328 = vmatprep.subr.bf16.mxu0 0
  %329 = vmatpush2.bf16.msra.mxu0 0
  %330 = vmatprep.subr.bf16.mxu0 0
  %331 = vmatpush2.bf16.msra.mxu0 0
  %332 = vmatprep.subr.bf16.mxu0 0
  %333 = vmatpush2.bf16.msra.mxu0 0
  %334 = vmatprep.mubr.bf16.mxu0 0
  %335 = vmatmul.mubr.bf16.gmra.mxu0 %v300
  %v336 = vpop.f32.mrf.mxu0
  %v337 = vadd.f32 0.0, %v336
  %v338 = vpop.f32.mrf.mxu0
  %v339 = vadd.f32 0.0, %v338
  %v340 = vpop.f32.mrf.mxu0
  %v341 = vadd.f32 0.0, %v340
  %v342 = vpop.f32.mrf.mxu0
  %v343 = vadd.f32 0.0, %v342
  %344 = vdwg.mxu0
  %v345 = vadd.f32 %v231, %v337
  %v346 = vadd.f32 %v233, %v339
  %v347 = vadd.f32 %v235, %v341
  %v348 = vadd.f32 %v237, %v343
  %s349 = scalar_lea.vmem %s0, 24
  %v350 = vld [vmem:[%s349] sm:$0xf]
  %v351 = vld [vmem:[%s349 + $0x4] sm:$0xf]
  %v352 = vunpack.c.l.bf16 %v350
  %v353 = vunpack.c.l.bf16 %v351
  %vm354 = vcmp.ge.f32.partialorder %v352, 0.0
  %vm355 = vcmp.ge.f32.partialorder %v353, 0.0
  %v356 = vmul.f32 %v352, 0.01
  %v357 = vmul.f32 %v353, 0.01
  %v358 = vsel %vm354, %v352, %v356
  %v359 = vsel %vm355, %v353, %v357
  %v360 = vpack.c.bf16 %v359, %v358
  %v361 = vld [vmem:[%s1 + $0xc0] sm:$0xff]
  %v362 = vld [vmem:[%s1 + $0xc8] sm:$0xff]
  %v363 = vld [vmem:[%s1 + $0xd0] sm:$0xff]
  %v364 = vld [vmem:[%s1 + $0xd8] sm:$0xff]
  %v365 = vld [vmem:[%s1 + $0xe0] sm:$0xff]
  %v366 = vld [vmem:[%s1 + $0xe8] sm:$0xff]
  %v367 = vld [vmem:[%s1 + $0xf0] sm:$0xff]
  %v368 = vld [vmem:[%s1 + $0xf8] sm:$0xff]
  %v377 = vunpack.c.l.b16 %v361
  %v378 = vunpack.c.h.b16 %v361
  %v379 = vunpack.c.l.b16 %v362
  %v380 = vunpack.c.h.b16 %v362
  %v381 = vunpack.c.l.b16 %v363
  %v382 = vunpack.c.h.b16 %v363
  %v383 = vunpack.c.l.b16 %v364
  %v384 = vunpack.c.h.b16 %v364
  %v385 = vunpack.c.l.b16 %v365
  %v386 = vunpack.c.h.b16 %v365
  %v387 = vunpack.c.l.b16 %v366
  %v388 = vunpack.c.h.b16 %v366
  %v389 = vunpack.c.l.b16 %v367
  %v390 = vunpack.c.h.b16 %v367
  %v391 = vunpack.c.l.b16 %v368
  %v392 = vunpack.c.h.b16 %v368
  %v393 = vpack.c.b16 %v379, %v377
  %v394 = vpack.c.b16 %v380, %v378
  %v395 = vpack.c.b16 %v383, %v381
  %v396 = vpack.c.b16 %v384, %v382
  %v397 = vpack.c.b16 %v387, %v385
  %v398 = vpack.c.b16 %v388, %v386
  %v399 = vpack.c.b16 %v391, %v389
  %v400 = vpack.c.b16 %v392, %v390
  %v410 = vsel %vm106, %v360, 0
  %412 = vmatprep.subr.bf16.mxu0 0
  %413 = vmatpush1.bf16.msra.mxu0 0
  %414 = vmatprep.subr.bf16.mxu0 0
  %415 = vmatpush1.bf16.msra.mxu0 0
  %416 = vmatprep.subr.bf16.mxu0 0
  %417 = vmatpush1.bf16.msra.mxu0 0
  %418 = vmatprep.subr.bf16.mxu0 0
  %419 = vmatpush1.bf16.msra.mxu0 0
  %420 = vmatprep.subr.bf16.mxu0 %v400
  %421 = vmatpush1.bf16.msra.mxu0 %v399
  %422 = vmatprep.subr.bf16.mxu0 %v398
  %423 = vmatpush1.bf16.msra.mxu0 %v397
  %424 = vmatprep.subr.bf16.mxu0 %v396
  %425 = vmatpush1.bf16.msra.mxu0 %v395
  %426 = vmatprep.subr.bf16.mxu0 %v394
  %427 = vmatpush1.bf16.msra.mxu0 %v393
  %428 = vmatprep.subr.bf16.mxu0 0
  %429 = vmatpush2.bf16.msra.mxu0 0
  %430 = vmatprep.subr.bf16.mxu0 0
  %431 = vmatpush2.bf16.msra.mxu0 0
  %432 = vmatprep.subr.bf16.mxu0 0
  %433 = vmatpush2.bf16.msra.mxu0 0
  %434 = vmatprep.subr.bf16.mxu0 0
  %435 = vmatpush2.bf16.msra.mxu0 0
  %436 = vmatprep.subr.bf16.mxu0 0
  %437 = vmatpush2.bf16.msra.mxu0 0
  %438 = vmatprep.subr.bf16.mxu0 0
  %439 = vmatpush2.bf16.msra.mxu0 0
  %440 = vmatprep.subr.bf16.mxu0 0
  %441 = vmatpush2.bf16.msra.mxu0 0
  %442 = vmatprep.subr.bf16.mxu0 0
  %443 = vmatpush2.bf16.msra.mxu0 0
  %444 = vmatprep.mubr.bf16.mxu0 0
  %445 = vmatmul.mubr.bf16.gmra.mxu0 %v410
  %v446 = vpop.f32.mrf.mxu0
  %v447 = vadd.f32 0.0, %v446
  %v448 = vpop.f32.mrf.mxu0
  %v449 = vadd.f32 0.0, %v448
  %v450 = vpop.f32.mrf.mxu0
  %v451 = vadd.f32 0.0, %v450
  %v452 = vpop.f32.mrf.mxu0
  %v453 = vadd.f32 0.0, %v452
  %454 = vdwg.mxu0
  %v455 = vadd.f32 %v345, %v447
  %v456 = vadd.f32 %v346, %v449
  %v457 = vadd.f32 %v347, %v451
  %v458 = vadd.f32 %v348, %v453
  %v459 = vld [vmem:[%s2] sm:$0x3]
  %v461 = vlaneseq
  %v462 = vshrl.u32 %v461, 7
  %v463 = vsub.s32 0, %v462
  %v464 = vrot.slane %v459, %v463
  %v465 = vlaneseq
  %v466 = vshrl.u32 %v465, 7
  %v467 = vsub.s32 1, %v466
  %v468 = vrot.slane %v459, %v467
  %v471 = vadd.f32 %v455, %v464
  %v472 = vadd.f32 %v456, %v468
  %v473 = vadd.f32 %v457, %v464
  %v474 = vadd.f32 %v458, %v468
  %v475 = vadd.f32 %v471, %v472
  %476 = vadd.xlane.f32.xlu0 %v475
  %v477 = vpop.xlane.xlu0 %476
  %v478 = vadd.f32 %v473, %v474
  %479 = vadd.xlane.f32.xlu0 %v478
  %v480 = vpop.xlane.xlu0 %479
  %v481 = vrcp.pop 256.0
  %v482 = vmul.f32 %v477, %v481
  %v483 = vmul.f32 %v480, %v481
  %v484 = vsub.f32 %v471, %v482
  %v485 = vsub.f32 %v472, %v482
  %v486 = vsub.f32 %v473, %v483
  %v487 = vsub.f32 %v474, %v483
  %v488 = vmul.f32 %v484, %v484
  %v489 = vmul.f32 %v485, %v485
  %v490 = vmul.f32 %v486, %v486
  %v491 = vmul.f32 %v487, %v487
  %v492 = vadd.f32 %v488, %v489
  %493 = vadd.xlane.f32.xlu0 %v492
  %v494 = vpop.xlane.xlu0 %493
  %v495 = vadd.f32 %v490, %v491
  %496 = vadd.xlane.f32.xlu0 %v495
  %v497 = vpop.xlane.xlu0 %496
  %v498 = vmul.f32 %v494, %v481
  %v499 = vmul.f32 %v497, %v481
  %v500 = vadd.f32 %v498, 1e-05
  %v501 = vadd.f32 %v499, 1e-05
  %v502 = vrsqrt.pop %v500
  %v503 = vrsqrt.pop %v501
  %v504 = vmul.f32 %v484, %v502
  %v505 = vmul.f32 %v485, %v502
  %v506 = vmul.f32 %v486, %v503
  %v507 = vmul.f32 %v487, %v503
  %v508 = vld [vmem:[%s3] sm:$0x3]
  %v510 = vlaneseq
  %v511 = vshrl.u32 %v510, 7
  %v512 = vsub.s32 0, %v511
  %v513 = vrot.slane %v508, %v512
  %v514 = vlaneseq
  %v515 = vshrl.u32 %v514, 7
  %v516 = vsub.s32 1, %v515
  %v517 = vrot.slane %v508, %v516
  %v520 = vmul.f32 %v504, %v513
  %v521 = vmul.f32 %v505, %v517
  %v522 = vmul.f32 %v506, %v513
  %v523 = vmul.f32 %v507, %v517
  %v524 = vld [vmem:[%s4] sm:$0x3]
  %v526 = vlaneseq
  %v527 = vshrl.u32 %v526, 7
  %v528 = vsub.s32 0, %v527
  %v529 = vrot.slane %v524, %v528
  %v530 = vlaneseq
  %v531 = vshrl.u32 %v530, 7
  %v532 = vsub.s32 1, %v531
  %v533 = vrot.slane %v524, %v532
  %v536 = vadd.f32 %v520, %v529
  %v537 = vadd.f32 %v521, %v533
  %v538 = vadd.f32 %v522, %v529
  %v539 = vadd.f32 %v523, %v533
  %v540 = vpack.c.bf16 %v538, %v536
  %v541 = vpack.c.bf16 %v539, %v537
  %v542 = vld [vmem:[%s5] sm:$0xf]
  %v543 = vld [vmem:[%s5 + $0x4] sm:$0xf]
  %v544 = vld [vmem:[%s5 + $0x8] sm:$0xf]
  %v545 = vld [vmem:[%s5 + $0xc] sm:$0xf]
  %v546 = vld [vmem:[%s5 + $0x10] sm:$0xf]
  %v547 = vld [vmem:[%s5 + $0x14] sm:$0xf]
  %v548 = vld [vmem:[%s5 + $0x18] sm:$0xf]
  %v549 = vld [vmem:[%s5 + $0x1c] sm:$0xf]
  %v550 = vld [vmem:[%s5 + $0x20] sm:$0xf]
  %v551 = vld [vmem:[%s5 + $0x24] sm:$0xf]
  %v552 = vld [vmem:[%s5 + $0x28] sm:$0xf]
  %v553 = vld [vmem:[%s5 + $0x2c] sm:$0xf]
  %v554 = vld [vmem:[%s5 + $0x30] sm:$0xf]
  %v555 = vld [vmem:[%s5 + $0x34] sm:$0xf]
  %v556 = vld [vmem:[%s5 + $0x38] sm:$0xf]
  %v557 = vld [vmem:[%s5 + $0x3c] sm:$0xf]
  %v558 = vld [vmem:[%s5 + $0x40] sm:$0xf]
  %v559 = vld [vmem:[%s5 + $0x44] sm:$0xf]
  %v560 = vld [vmem:[%s5 + $0x48] sm:$0xf]
  %v561 = vld [vmem:[%s5 + $0x4c] sm:$0xf]
  %v562 = vld [vmem:[%s5 + $0x50] sm:$0xf]
  %v563 = vld [vmem:[%s5 + $0x54] sm:$0xf]
  %v564 = vld [vmem:[%s5 + $0x58] sm:$0xf]
  %v565 = vld [vmem:[%s5 + $0x5c] sm:$0xf]
  %v566 = vld [vmem:[%s5 + $0x60] sm:$0xf]
  %v567 = vld [vmem:[%s5 + $0x64] sm:$0xf]
  %v568 = vld [vmem:[%s5 + $0x68] sm:$0xf]
  %v569 = vld [vmem:[%s5 + $0x6c] sm:$0xf]
  %v570 = vld [vmem:[%s5 + $0x70] sm:$0xf]
  %v571 = vld [vmem:[%s5 + $0x74] sm:$0xf]
  %v572 = vld [vmem:[%s5 + $0x78] sm:$0xf]
  %v573 = vld [vmem:[%s5 + $0x7c] sm:$0xf]
  %v574 = vld [vmem:[%s6] sm:$0x1]
  %v576 = vlaneseq
  %v577 = vshrl.u32 %v576, 7
  %v578 = vsub.s32 0, %v577
  %v579 = vrot.slane %v574, %v578
  %v613 = vunpack.c.l.b16 %v542
  %v614 = vunpack.c.l.b16 %v543
  %v615 = vunpack.c.l.b16 %v544
  %v616 = vunpack.c.l.b16 %v545
  %v617 = vunpack.c.l.b16 %v546
  %v618 = vunpack.c.l.b16 %v547
  %v619 = vunpack.c.l.b16 %v548
  %v620 = vunpack.c.l.b16 %v549
  %v621 = vunpack.c.l.b16 %v550
  %v622 = vunpack.c.l.b16 %v551
  %v623 = vunpack.c.l.b16 %v552
  %v624 = vunpack.c.l.b16 %v553
  %v625 = vunpack.c.l.b16 %v554
  %v626 = vunpack.c.l.b16 %v555
  %v627 = vunpack.c.l.b16 %v556
  %v628 = vunpack.c.l.b16 %v557
  %v629 = vunpack.c.l.b16 %v558
  %v630 = vunpack.c.l.b16 %v559
  %v631 = vunpack.c.l.b16 %v560
  %v632 = vunpack.c.l.b16 %v561
  %v633 = vunpack.c.l.b16 %v562
  %v634 = vunpack.c.l.b16 %v563
  %v635 = vunpack.c.l.b16 %v564
  %v636 = vunpack.c.l.b16 %v565
  %v637 = vunpack.c.l.b16 %v566
  %v638 = vunpack.c.l.b16 %v567
  %v639 = vunpack.c.l.b16 %v568
  %v640 = vunpack.c.l.b16 %v569
  %v641 = vunpack.c.l.b16 %v570
  %v642 = vunpack.c.l.b16 %v571
  %v643 = vunpack.c.l.b16 %v572
  %v644 = vunpack.c.l.b16 %v573
  %v645 = vpack.c.b16 %v614, %v613
  %v646 = vpack.c.b16 %v616, %v615
  %v647 = vpack.c.b16 %v618, %v617
  %v648 = vpack.c.b16 %v620, %v619
  %v649 = vpack.c.b16 %v622, %v621
  %v650 = vpack.c.b16 %v624, %v623
  %v651 = vpack.c.b16 %v626, %v625
  %v652 = vpack.c.b16 %v628, %v627
  %v653 = vpack.c.b16 %v630, %v629
  %v654 = vpack.c.b16 %v632, %v631
  %v655 = vpack.c.b16 %v634, %v633
  %v656 = vpack.c.b16 %v636, %v635
  %v657 = vpack.c.b16 %v638, %v637
  %v658 = vpack.c.b16 %v640, %v639
  %v659 = vpack.c.b16 %v642, %v641
  %v660 = vpack.c.b16 %v644, %v643
  %677 = vmatprep.subr.bf16.mxu0 0
  %678 = vmatpush1.bf16.msra.mxu0 %v652
  %679 = vmatprep.subr.bf16.mxu0 0
  %680 = vmatpush1.bf16.msra.mxu0 %v651
  %681 = vmatprep.subr.bf16.mxu0 0
  %682 = vmatpush1.bf16.msra.mxu0 %v650
  %683 = vmatprep.subr.bf16.mxu0 0
  %684 = vmatpush1.bf16.msra.mxu0 %v649
  %685 = vmatprep.subr.bf16.mxu0 0
  %686 = vmatpush1.bf16.msra.mxu0 %v648
  %687 = vmatprep.subr.bf16.mxu0 0
  %688 = vmatpush1.bf16.msra.mxu0 %v647
  %689 = vmatprep.subr.bf16.mxu0 0
  %690 = vmatpush1.bf16.msra.mxu0 %v646
  %691 = vmatprep.subr.bf16.mxu0 0
  %692 = vmatpush1.bf16.msra.mxu0 %v645
  %693 = vmatprep.subr.bf16.mxu0 0
  %694 = vmatpush2.bf16.msra.mxu0 %v660
  %695 = vmatprep.subr.bf16.mxu0 0
  %696 = vmatpush2.bf16.msra.mxu0 %v659
  %697 = vmatprep.subr.bf16.mxu0 0
  %698 = vmatpush2.bf16.msra.mxu0 %v658
  %699 = vmatprep.subr.bf16.mxu0 0
  %700 = vmatpush2.bf16.msra.mxu0 %v657
  %701 = vmatprep.subr.bf16.mxu0 0
  %702 = vmatpush2.bf16.msra.mxu0 %v656
  %703 = vmatprep.subr.bf16.mxu0 0
  %704 = vmatpush2.bf16.msra.mxu0 %v655
  %705 = vmatprep.subr.bf16.mxu0 0
  %706 = vmatpush2.bf16.msra.mxu0 %v654
  %707 = vmatprep.subr.bf16.mxu0 0
  %708 = vmatpush2.bf16.msra.mxu0 %v653
  %709 = vmatprep.mubr.bf16.mxu0 %v541
  %710 = vmatmul.mubr.bf16.gmra.mxu0 %v540
  %v711 = vpop.f32.mrf.mxu0
  %v712 = vadd.f32 %v579, %v711
  %v713 = vpop.f32.mrf.mxu0
  %v714 = vpop.f32.mrf.mxu0
  %v715 = vadd.f32 %v579, %v714
  %v716 = vpop.f32.mrf.mxu0
  %717 = vdwg.mxu0
  %718 = vst [vmem:[%s7] sm:$0xff] %v712
  %719 = vst [vmem:[%s7 + $0x8] sm:$0xff] %v715
  // Predicated region
  $region30: #{tg_classifier_forward.1} parent=0 // pred_check
    _
  $region31: #{tg_classifier_forward.1} parent=0 // pred_check_branch
    %721 = sbr.rel (0) target = $region33
  $region32: #{tg_classifier_forward.1} parent=0 // pred_region
    _
  $region33: #{tg_classifier_forward.1} parent=0 // pred_fallthru
    _
  // Predicated region
  $region34: #{tg_classifier_forward.1} parent=0 // pred_check
    _
  $region35: #{tg_classifier_forward.1} parent=0 // pred_check_branch
    %723 = sbr.rel (0) target = $region37
  $region36: #{tg_classifier_forward.1} parent=0 // pred_region
    _
  $region37: #{tg_classifier_forward.1} parent=0 // pred_fallthru
    _

</llo_original>
